<compile_context>
chip_gen: v5e
topology: v5e:2x2
jax: 0.10.0
libtpu: 0.0.40
codegen_flags: <defaults>
</compile_context>

<pallas_src>
import jax
import jax.numpy as jnp
from jax.experimental import pallas as pl
from jax.experimental.pallas import tpu as pltpu


def _round_up(x, m):
    return (x + m - 1) // m * m


def _w2v_encoder_kernel(frames_ref, wfe_ref, bfe_ref, wlin_ref, blin_ref,
                        hs_ref):
    """One row-tile of the W2VEncoder forward.

    Stand-in wav2vec feature extraction (framed matmul + bias + GELU) fused
    with the w2v_linear projection (matmul + bias).  Matmuls run in bf16 on
    the MXU with f32 accumulation; bias adds and GELU stay in f32.
    """
    # --- stand-in wav2vec.extract_features (strided conv == framed matmul) ---
    feat = jnp.dot(frames_ref[...], wfe_ref[...],
                   preferred_element_type=jnp.float32)
    # TODO(synk): PyTorch nn.GELU defaults to exact erf; the tanh approximation
    # (EUP-resident, free slot) is used here — the surrounding feature
    # extractor is already a stand-in for the external pretrained
    # wav2vec.extract_features, so exactness is moot.
    feat = jax.nn.gelu(feat + bfe_ref[...], approximate=True)

    # --- self.w2v_linear(hs_pad) : Linear(idim, adim) ---
    hs = jnp.dot(feat.astype(jnp.bfloat16), wlin_ref[...],
                 preferred_element_type=jnp.float32)
    hs_ref[...] = (hs + blin_ref[...]).astype(hs_ref.dtype)


def w2v_encoder(audio_pad, audio_pad_mask, wfe, bfe, wlin, blin, *, tm=512):
    """JAX wrapper reproducing W2VEncoder.forward.

    audio_pad:      (B, L)  float32 raw audio
    audio_pad_mask: (B, L)  bool, True = padded sample
    wfe: (K, idim), bfe: (1, idim)       -- stand-in feature-extractor params
    wlin: (idim, adim), blin: (1, adim)  -- w2v_linear params
    Returns (hs_pad (B, T, adim) float32, hs_mask (B, T) bool, True = valid).
    """
    B, L = audio_pad.shape
    K, idim = wfe.shape
    adim = wlin.shape[1]
    assert L % K == 0
    T = L // K
    R = B * T  # total rows (batch * time)

    # --- hs_mask = ~pad_mask : trivial elementwise, done outside the kernel ---
    # TODO(synk): frame is marked padded iff ALL K samples are padded; confirm
    # against wav2vec's own length-downsampling rule at boundary frames.
    pad_mask = jnp.all(audio_pad_mask.reshape(B, T, K), axis=-1)
    hs_mask = ~pad_mask  # True = valid

    # --- lane-dense padding of the (resident) weight slabs only ---
    Ip = _round_up(idim, 128)    # output of matmul 1 / contraction of matmul 2
    Ap = _round_up(adim, 128)    # output of matmul 2 (lane-dense hs store)

    # Row tile: large enough to amortize the ~0.35 us per-grid-step overhead,
    # but never larger than the (8-rounded) row count for small inputs.
    tm = min(tm, _round_up(R, 8))
    Rp = _round_up(R, tm)

    # Frame the audio (stride == kernel, so framing is a pure reshape).  The
    # lane dim stays at its natural width K (block spans the full dim); rows
    # are zero-padded to a tile multiple.  bf16 halves the dominant HBM read
    # traffic and feeds the bf16-native MXU; zero rows leave results exact.
    frames = jnp.pad(audio_pad.reshape(R, K).astype(jnp.bfloat16),
                     ((0, Rp - R), (0, 0)))

    wfe_p = jnp.pad(wfe.astype(jnp.bfloat16), ((0, 0), (0, Ip - idim)))
    bfe_p = jnp.pad(bfe.astype(jnp.float32), ((0, 0), (0, Ip - idim)))
    wlin_p = jnp.pad(wlin.astype(jnp.bfloat16),
                     ((0, Ip - idim), (0, Ap - adim)))
    blin_p = jnp.pad(blin.astype(jnp.float32), ((0, 0), (0, Ap - adim)))

    grid = (Rp // tm,)

    cost = pl.CostEstimate(
        flops=2 * Rp * Ip * (K + Ap),
        transcendentals=Rp * Ip,
        bytes_accessed=(Rp * K * 2 + K * Ip * 2 + Ip * Ap * 2
                        + (Ip + Ap) * 4 + Rp * Ap * 4),
    )

    hs2d = pl.pallas_call(
        _w2v_encoder_kernel,
        out_shape=jax.ShapeDtypeStruct((Rp, Ap), jnp.float32),
        grid_spec=pltpu.PrefetchScalarGridSpec(
            num_scalar_prefetch=0,
            grid=grid,
            in_specs=[
                pl.BlockSpec((tm, K), lambda i: (i, 0)),    # frames (row tile)
                pl.BlockSpec((K, Ip), lambda i: (0, 0)),    # wfe  (resident)
                pl.BlockSpec((1, Ip), lambda i: (0, 0)),    # bfe  (resident)
                pl.BlockSpec((Ip, Ap), lambda i: (0, 0)),   # wlin (resident)
                pl.BlockSpec((1, Ap), lambda i: (0, 0)),    # blin (resident)
            ],
            out_specs=pl.BlockSpec((tm, Ap), lambda i: (i, 0)),  # lane-dense hs
        ),
        compiler_params=pltpu.CompilerParams(
            dimension_semantics=("parallel",)),
        cost_estimate=cost,
    )(frames, wfe_p, bfe_p, wlin_p, blin_p)

    hs_pad = hs2d[:R, :adim].reshape(B, T, adim)
    return hs_pad, hs_mask


if __name__ == "__main__":
    # Small shapes consistent with the module's forward.
    B, L = 2, 64          # batch, raw audio samples
    K = 8                 # stand-in feature-extractor frame size (stride == kernel)
    T = L // K            # downsampled sequence length
    IDIM, ADIM = 32, 48   # wav2vec feature dim -> attention dim

    key = jax.random.PRNGKey(0)
    k_audio, k_wfe, k_bfe, k_wlin, k_blin = jax.random.split(key, 5)

    audio_pad = jax.random.normal(k_audio, (B, L), dtype=jnp.float32)
    lengths = jnp.array([L, 3 * L // 4], dtype=jnp.int32)
    # True = padded sample (wav2vec-style padding mask).
    audio_pad_mask = jnp.arange(L)[None, :] >= lengths[:, None]

    # Deterministic synthetic parameters (shapes from __init__: Linear(idim, adim)).
    # TODO(synk): the full wav2vec transformer stack inside extract_features is
    # an external pretrained module; a deterministic framed-matmul + GELU
    # feature extractor stands in for it.
    wfe = 0.1 * jax.random.normal(k_wfe, (K, IDIM), dtype=jnp.float32)
    bfe = 0.1 * jax.random.normal(k_bfe, (1, IDIM), dtype=jnp.float32)
    wlin = 0.1 * jax.random.normal(k_wlin, (IDIM, ADIM), dtype=jnp.float32)
    blin = 0.1 * jax.random.normal(k_blin, (1, ADIM), dtype=jnp.float32)

    hs_pad, hs_mask = w2v_encoder(audio_pad, audio_pad_mask, wfe, bfe, wlin, blin)
    jax.block_until_ready((hs_pad, hs_mask))

    # Light sanity check against a pure-JAX reference of the same stand-in math.
    feat_ref = jax.nn.gelu(
        audio_pad.reshape(B * T, K) @ wfe + bfe, approximate=True)
    hs_ref = (feat_ref @ wlin + blin).reshape(B, T, ADIM)
    assert jnp.allclose(hs_pad, hs_ref, atol=2e-2, rtol=2e-2)

    assert hs_pad.shape == (B, T, ADIM) and hs_pad.dtype == jnp.float32
    assert hs_mask.shape == (B, T) and hs_mask.dtype == jnp.bool_
    print("KERNEL_OK")
</pallas_src>

<mosaic_0001>
module attributes {stable_mosaic.version = 11 : i64} {
  func.func @_w2v_encoder_kernel(%arg0: i32, %arg1: memref<16x8xbf16, #tpu.memory_space<vmem>>, %arg2: memref<8x128xbf16, #tpu.memory_space<vmem>>, %arg3: memref<1x128xf32, #tpu.memory_space<vmem>>, %arg4: memref<128x128xbf16, #tpu.memory_space<vmem>>, %arg5: memref<1x128xf32, #tpu.memory_space<vmem>>, %arg6: memref<16x128xf32, #tpu.memory_space<vmem>>) attributes {dimension_semantics = [#tpu.dimension_semantics<parallel>], iteration_bounds = array<i64: 1>, scalar_prefetch = 0 : i64, scratch_operands = 0 : i64, tpu.core_type = #tpu.core_type<tc>, window_params = [{transform_indices = @transform_0, window_bounds = array<i64: 16, 8>}, {pipeline_mode = #tpu.pipeline_mode<synchronous>, transform_indices = @transform_1, window_bounds = array<i64: 8, 128>}, {pipeline_mode = #tpu.pipeline_mode<synchronous>, transform_indices = @transform_2, window_bounds = array<i64: 1, 128>}, {pipeline_mode = #tpu.pipeline_mode<synchronous>, transform_indices = @transform_3, window_bounds = array<i64: 128, 128>}, {pipeline_mode = #tpu.pipeline_mode<synchronous>, transform_indices = @transform_4, window_bounds = array<i64: 1, 128>}, {transform_indices = @transform_5, window_bounds = array<i64: 16, 128>}]} {
    %c0 = arith.constant 0 : index
    %c0_0 = arith.constant 0 : index
    %0 = vector.load %arg1[%c0, %c0_0] : memref<16x8xbf16, #tpu.memory_space<vmem>>, vector<16x8xbf16>
    %c0_1 = arith.constant 0 : index
    %c0_2 = arith.constant 0 : index
    %1 = vector.load %arg2[%c0_1, %c0_2] : memref<8x128xbf16, #tpu.memory_space<vmem>>, vector<8x128xbf16>
    %cst = arith.constant dense<0.000000e+00> : vector<16x128xf32>
    %2 = tpu.matmul %0, %1, %cst {dimension_numbers = #tpu.dot_dimension_numbers<[1], [0], [0], [1], [0, 0, 1, 1], [], []>} : vector<16x8xbf16>, vector<8x128xbf16>, vector<16x128xf32> -> vector<16x128xf32>
    %c0_3 = arith.constant 0 : index
    %c0_4 = arith.constant 0 : index
    %3 = vector.load %arg3[%c0_3, %c0_4] : memref<1x128xf32, #tpu.memory_space<vmem>>, vector<1x128xf32>
    %4 = vector.broadcast %3 : vector<1x128xf32> to vector<16x128xf32>
    %5 = arith.addf %2, %4 : vector<16x128xf32>
    %6 = arith.mulf %5, %5 : vector<16x128xf32>
    %7 = arith.mulf %5, %6 : vector<16x128xf32>
    %cst_5 = arith.constant 4.471500e-02 : f32
    %8 = vector.broadcast %cst_5 : f32 to vector<16x128xf32>
    %9 = arith.mulf %8, %7 : vector<16x128xf32>
    %10 = arith.addf %5, %9 : vector<16x128xf32>
    %cst_6 = arith.constant 0.797884583 : f32
    %11 = vector.broadcast %cst_6 : f32 to vector<16x128xf32>
    %12 = arith.mulf %11, %10 : vector<16x128xf32>
    %13 = math.tanh %12 : vector<16x128xf32>
    %cst_7 = arith.constant 1.000000e+00 : f32
    %14 = vector.broadcast %cst_7 : f32 to vector<16x128xf32>
    %15 = arith.addf %14, %13 : vector<16x128xf32>
    %cst_8 = arith.constant 5.000000e-01 : f32
    %16 = vector.broadcast %cst_8 : f32 to vector<16x128xf32>
    %17 = arith.mulf %16, %15 : vector<16x128xf32>
    %18 = arith.mulf %5, %17 : vector<16x128xf32>
    %19 = arith.truncf %18 : vector<16x128xf32> to vector<16x128xbf16>
    %c0_9 = arith.constant 0 : index
    %c0_10 = arith.constant 0 : index
    %20 = vector.load %arg4[%c0_9, %c0_10] : memref<128x128xbf16, #tpu.memory_space<vmem>>, vector<128x128xbf16>
    %cst_11 = arith.constant dense<0.000000e+00> : vector<16x128xf32>
    %21 = tpu.matmul %19, %20, %cst_11 {dimension_numbers = #tpu.dot_dimension_numbers<[1], [0], [0], [1], [0, 0, 1, 1], [], []>} : vector<16x128xbf16>, vector<128x128xbf16>, vector<16x128xf32> -> vector<16x128xf32>
    %c0_12 = arith.constant 0 : index
    %c0_13 = arith.constant 0 : index
    %22 = vector.load %arg5[%c0_12, %c0_13] : memref<1x128xf32, #tpu.memory_space<vmem>>, vector<1x128xf32>
    %23 = vector.broadcast %22 : vector<1x128xf32> to vector<16x128xf32>
    %24 = arith.addf %21, %23 : vector<16x128xf32>
    %c0_14 = arith.constant 0 : index
    %c0_15 = arith.constant 0 : index
    %25 = vector.load %arg6[%c0_14, %c0_15] : memref<16x128xf32, #tpu.memory_space<vmem>>, vector<16x128xf32>
    tpu.vector_store %arg6[%c0_14, %c0_15], %24 {strides = array<i32>} : memref<16x128xf32, #tpu.memory_space<vmem>>, vector<16x128xf32>,
    return
  }
  func.func @transform_0(%arg0: i32) -> (i32, i32) {
    %c0_i32 = arith.constant 0 : i32
    %c0_i32_0 = arith.constant 0 : i32
    return %arg0, %c0_i32 : i32, i32
  }
  func.func @transform_1(%arg0: i32) -> (i32, i32) {
    %c0_i32 = arith.constant 0 : i32
    %c0_i32_0 = arith.constant 0 : i32
    %c0_i32_1 = arith.constant 0 : i32
    return %c0_i32, %c0_i32_0 : i32, i32
  }
  func.func @transform_2(%arg0: i32) -> (i32, i32) {
    %c0_i32 = arith.constant 0 : i32
    %c0_i32_0 = arith.constant 0 : i32
    %c0_i32_1 = arith.constant 0 : i32
    return %c0_i32, %c0_i32_0 : i32, i32
  }
  func.func @transform_3(%arg0: i32) -> (i32, i32) {
    %c0_i32 = arith.constant 0 : i32
    %c0_i32_0 = arith.constant 0 : i32
    %c0_i32_1 = arith.constant 0 : i32
    return %c0_i32, %c0_i32_0 : i32, i32
  }
  func.func @transform_4(%arg0: i32) -> (i32, i32) {
    %c0_i32 = arith.constant 0 : i32
    %c0_i32_0 = arith.constant 0 : i32
    %c0_i32_1 = arith.constant 0 : i32
    return %c0_i32, %c0_i32_0 : i32, i32
  }
  func.func @transform_5(%arg0: i32) -> (i32, i32) {
    %c0_i32 = arith.constant 0 : i32
    %c0_i32_0 = arith.constant 0 : i32
    return %arg0, %c0_i32 : i32, i32
  }
}

</mosaic_0001>

<llo_original>
// kernel: tpu_custom_call.1
$region0: #{tpu_custom_call.1}
  #allocation0 [shape = 'u32[]', space=smem, size = 0x4, offset = 0x4, fixed_abs, tag = 'smem constant byte address 0x4 - core index']
  #allocation1 [shape = 'u32[72,128]{1,0:T(1,128)}', space=vmem, size = 0x9000, scoped, tag = 'internal scratch']
  %s0 = inlined_call_operand.vmem [shape: bf16[16,8], index: 0, kind: input, shape index: {}]
  %s1 = inlined_call_operand.vmem [shape: bf16[8,128], index: 1, kind: input, shape index: {}]
  %s2 = inlined_call_operand.vmem [shape: f32[1,128], index: 2, kind: input, shape index: {}]
  %s3 = inlined_call_operand.hbm [shape: bf16[128,128], index: 3, kind: input, shape index: {}]
  %s4 = inlined_call_operand.vmem [shape: f32[1,128], index: 4, kind: input, shape index: {}]
  %s5 = inlined_call_operand.hbm [shape: f32[16,128], index: 5, kind: output, shape index: {}]
  %s6 = sld [smem:[#allocation0]]
  $region34: #{tpu_custom_call.1} parent=0
    _
  %s8 = ssub.s32 1, %s6
  %s9 = scalar_select 0, %s8, %s6
  $region1: #{tpu_custom_call.1} parent=0
    #allocation2 [shape = 'u8[32768]{0}', space=vmem, size = 0x8000, scoped, tag = 'input window, operand 3, single buffered']
    #allocation3 [shape = 's32[1]{0}', space=sflag, size = 0x4, scoped, tag = 'scoped memory for tpu_custom_call.1']
    #allocation4 [shape = 's32[1]{0}', space=sflag, size = 0x4, scoped, tag = 'scoped memory for tpu_custom_call.1']
    #allocation5 [shape = 'u8[8192]{0}', space=vmem, size = 0x2000, scoped, tag = 'output window, operand 0, single buffered']
    %10 = vsyncpa [#allocation3], 0
    %11 = vsyncpa [#allocation4], 0
    // Predicated region
    $region2: #{tpu_custom_call.1} parent=1 // pred_check
      _
    $region3: #{tpu_custom_call.1} parent=1 // pred_check_branch
      %13 = sbr.rel (0) target = $region5
    $region4: #{tpu_custom_call.1} parent=1 // pred_region
      _
    $region5: #{tpu_custom_call.1} parent=1 // pred_fallthru
      _
    // Predicated region
    $region6: #{tpu_custom_call.1} parent=1 // pred_check
      _
    $region7: #{tpu_custom_call.1} parent=1 // pred_check_branch
      %15 = sbr.rel (0) target = $region9
    $region8: #{tpu_custom_call.1} parent=1 // pred_region
      _
    $region9: #{tpu_custom_call.1} parent=1 // pred_fallthru
      _
    // Predicated region
    $region10: #{tpu_custom_call.1} parent=1 // pred_check
      _
    $region11: #{tpu_custom_call.1} parent=1 // pred_check_branch
      %17 = sbr.rel (0) target = $region13
    $region12: #{tpu_custom_call.1} parent=1 // pred_region
      _
    $region13: #{tpu_custom_call.1} parent=1 // pred_fallthru
      _
    // Predicated region
    $region14: #{tpu_custom_call.1} parent=1 // pred_check
      _
    $region15: #{tpu_custom_call.1} parent=1 // pred_check_branch
      %19 = sbr.rel (0) target = $region17
    $region16: #{tpu_custom_call.1} parent=1 // pred_region
      %21 = vsyncadd [#allocation3], 0
      %s22 = sshll.u32 %s3, 4
      %s23 = int_to_ptr.hbm [resolvable:$true] %s22
      %s24 = sshll.u32 [#allocation2], 4
      %s25 = int_to_ptr.vmem [resolvable:$true] %s24
      %30 = dma.hbm_to_vmem [thread:$0]  %s23, 1024, %s25, [#allocation3], 64, 64, 4
    $region17: #{tpu_custom_call.1} parent=1 // pred_fallthru
      _
    // Predicated region
    $region18: #{tpu_custom_call.1} parent=1 // pred_check
      _
    $region19: #{tpu_custom_call.1} parent=1 // pred_check_branch
      %32 = sbr.rel (0) target = $region21
    $region20: #{tpu_custom_call.1} parent=1 // pred_region
      _
    $region21: #{tpu_custom_call.1} parent=1 // pred_fallthru
      _
    // Predicated region
    $region22: #{tpu_custom_call.1} parent=1 // pred_check
      _
    $region23: #{tpu_custom_call.1} parent=1 // pred_check_branch
      %34 = sbr.rel (0) target = $region25
    $region24: #{tpu_custom_call.1} parent=1 // pred_region
      %36 = dma.done [#allocation3], 1024
    $region25: #{tpu_custom_call.1} parent=1 // pred_fallthru
      _
    %v38 = vld [vmem:[%s0] sm:$0xf]
    %v39 = vld [vmem:[%s0 + $0x4] sm:$0xf]
    %v40 = vld [vmem:[%s1] sm:$0xf]
    %v41 = vld [vmem:[%s2] sm:$0x1]
    %v43 = vperm.slane %v41, 0
    %v47 = vunpack.c.l.b16 %v38
    %v48 = vunpack.c.l.b16 %v39
    %v49 = vpack.c.b16 %v48, %v47
    %vm50 = vcmask 64512
    %v52 = vsel %vm50, %v49, 0
    %vm54 = vcmask 1043456
    %v56 = vsel %vm54, %v40, 0
    %58 = vmatpush.bf16.msra.mxu0 0
    %59 = vmatpush.bf16.msra.mxu0 0
    %60 = vmatpush.bf16.msra.mxu0 0
    %61 = vmatpush.bf16.msra.mxu0 0
    %62 = vmatpush.bf16.msra.mxu0 0
    %63 = vmatpush.bf16.msra.mxu0 0
    %64 = vmatpush.bf16.msra.mxu0 0
    %65 = vmatpush.bf16.msra.mxu0 %v56
    %66 = vmatmul.bf16.gmra.mxu0 %v52
    %v67 = vpop.f32.mrf.mxu0
    %v68 = vadd.f32 %v43, %v67
    %v69 = vpop.f32.mrf.mxu0
    %v70 = vadd.f32 %v43, %v69
    %71 = vdwg.mxu0
    %v72 = vmul.f32 %v68, %v68
    %v73 = vmul.f32 %v70, %v70
    %v74 = vmul.f32 %v68, %v72
    %v75 = vmul.f32 %v70, %v73
    %v76 = vmul.f32 %v74, 0.044715
    %v77 = vmul.f32 %v75, 0.044715
    %v78 = vadd.f32 %v68, %v76
    %v79 = vadd.f32 %v70, %v77
    %v80 = vmul.f32 %v78, 0.7978846
    %v81 = vmul.f32 %v79, 0.7978846
    %v82 = vtanh.pop %v80
    %v83 = vtanh.pop %v81
    %v84 = vadd.f32 %v82, 1.0
    %v85 = vadd.f32 %v83, 1.0
    %v86 = vmul.f32 %v84, 0.5
    %v87 = vmul.f32 %v85, 0.5
    %v88 = vmul.f32 %v68, %v86
    %v89 = vmul.f32 %v70, %v87
    %v90 = vpack.c.bf16 %v89, %v88
    %v91 = vld [vmem:[#allocation2] sm:$0xf]
    %v92 = vld [vmem:[#allocation2 + $0x4] sm:$0xf]
    %v93 = vld [vmem:[#allocation2 + $0x8] sm:$0xf]
    %v94 = vld [vmem:[#allocation2 + $0xc] sm:$0xf]
    %v95 = vld [vmem:[#allocation2 + $0x10] sm:$0xf]
    %v96 = vld [vmem:[#allocation2 + $0x14] sm:$0xf]
    %v97 = vld [vmem:[#allocation2 + $0x18] sm:$0xf]
    %v98 = vld [vmem:[#allocation2 + $0x1c] sm:$0xf]
    %v99 = vld [vmem:[#allocation2 + $0x20] sm:$0xf]
    %v100 = vld [vmem:[#allocation2 + $0x24] sm:$0xf]
    %v101 = vld [vmem:[#allocation2 + $0x28] sm:$0xf]
    %v102 = vld [vmem:[#allocation2 + $0x2c] sm:$0xf]
    %v103 = vld [vmem:[#allocation2 + $0x30] sm:$0xf]
    %v104 = vld [vmem:[#allocation2 + $0x34] sm:$0xf]
    %v105 = vld [vmem:[#allocation2 + $0x38] sm:$0xf]
    %v106 = vld [vmem:[#allocation2 + $0x3c] sm:$0xf]
    %v107 = vld [vmem:[%s4] sm:$0x1]
    %v109 = vperm.slane %v107, 0
    %v127 = vunpack.c.l.b16 %v91
    %v128 = vunpack.c.l.b16 %v92
    %v129 = vunpack.c.l.b16 %v93
    %v130 = vunpack.c.l.b16 %v94
    %v131 = vunpack.c.l.b16 %v95
    %v132 = vunpack.c.l.b16 %v96
    %v133 = vunpack.c.l.b16 %v97
    %v134 = vunpack.c.l.b16 %v98
    %v135 = vunpack.c.l.b16 %v99
    %v136 = vunpack.c.l.b16 %v100
    %v137 = vunpack.c.l.b16 %v101
    %v138 = vunpack.c.l.b16 %v102
    %v139 = vunpack.c.l.b16 %v103
    %v140 = vunpack.c.l.b16 %v104
    %v141 = vunpack.c.l.b16 %v105
    %v142 = vunpack.c.l.b16 %v106
    %v143 = vpack.c.b16 %v128, %v127
    %v144 = vpack.c.b16 %v130, %v129
    %v145 = vpack.c.b16 %v132, %v131
    %v146 = vpack.c.b16 %v134, %v133
    %v147 = vpack.c.b16 %v136, %v135
    %v148 = vpack.c.b16 %v138, %v137
    %v149 = vpack.c.b16 %v140, %v139
    %v150 = vpack.c.b16 %v142, %v141
    %159 = vmatpush.bf16.msra.mxu0 %v150
    %160 = vmatpush.bf16.msra.mxu0 %v149
    %161 = vmatpush.bf16.msra.mxu0 %v148
    %162 = vmatpush.bf16.msra.mxu0 %v147
    %163 = vmatpush.bf16.msra.mxu0 %v146
    %164 = vmatpush.bf16.msra.mxu0 %v145
    %165 = vmatpush.bf16.msra.mxu0 %v144
    %166 = vmatpush.bf16.msra.mxu0 %v143
    %167 = vmatmul.bf16.gmra.mxu0 %v90
    %v168 = vpop.f32.mrf.mxu0
    %v169 = vadd.f32 %v109, %v168
    %v170 = vpop.f32.mrf.mxu0
    %v171 = vadd.f32 %v109, %v170
    %172 = vdwg.mxu0
    %173 = vst [vmem:[#allocation5] sm:$0xff] %v169
    %174 = vst [vmem:[#allocation5 + $0x8] sm:$0xff] %v171
    // Predicated region
    $region26: #{tpu_custom_call.1} parent=1 // pred_check
      _
    $region27: #{tpu_custom_call.1} parent=1 // pred_check_branch
      %176 = sbr.rel (0) target = $region29
    $region28: #{tpu_custom_call.1} parent=1 // pred_region
      %178 = vsyncadd [#allocation4], 0
      %s179 = sshll.u32 [#allocation5], 4
      %s180 = int_to_ptr.vmem [resolvable:$true] %s179
      %s181 = sshll.u32 %s5, 4
      %s182 = int_to_ptr.hbm [resolvable:$true] %s181
      %187 = dma.vmem_to_hbm [thread:$0]  %s180, 256, %s182, [#allocation4], 128, 128, 8
    $region29: #{tpu_custom_call.1} parent=1 // pred_fallthru
      _
    // Predicated region
    $region30: #{tpu_custom_call.1} parent=1 // pred_check
      _
    $region31: #{tpu_custom_call.1} parent=1 // pred_check_branch
      %189 = sbr.rel (0) target = $region33
    $region32: #{tpu_custom_call.1} parent=1 // pred_region
      %191 = dma.done [#allocation4], 256
    $region33: #{tpu_custom_call.1} parent=1 // pred_fallthru
      _
    %192 = vsyncpa [#allocation3], 1
    %193 = vsyncpa [#allocation4], 1

</llo_original>
